<compile_context>
chip_gen: v7x
topology: tpu7x:2x2x1
jax: 0.10.0
libtpu: 0.0.40
codegen_flags: <defaults>
</compile_context>

<pallas_src>
import math

import jax
import jax.numpy as jnp
from jax.experimental import pallas as pl
from jax.experimental.pallas import tpu as pltpu


def _round_up(v: int, m: int) -> int:
    return ((v + m - 1) // m) * m


def _round_down(v: int, m: int) -> int:
    return (v // m) * m


def make_positional_encoding(d_model: int, max_len: int = 5000) -> jnp.ndarray:
    """Sinusoidal pe buffer, shape [1, max_len, d_model] (matches the PyTorch module)."""
    position = jnp.arange(0, max_len, dtype=jnp.float32)[:, None]            # [max_len, 1]
    div_term = jnp.exp(
        jnp.arange(0, d_model, 2, dtype=jnp.float32) * (-math.log(10000.0) / d_model)
    )                                                                         # [ceil(d/2)]
    pe = jnp.zeros((max_len, d_model), dtype=jnp.float32)
    pe = pe.at[:, 0::2].set(jnp.sin(position * div_term))
    pe = pe.at[:, 1::2].set(jnp.cos(position * div_term[: d_model // 2]))
    return pe[None, :, :]                                                     # [1, max_len, d_model]


def _pos_enc_kernel(x_ref, pe_ref, o_ref):
    # x_ref/o_ref: (Bblk, TS, C) tile; pe_ref: (1, TS, C) tile shared across the
    # batch block (broadcast over the leading dim is free on the VPU here).
    o_ref[...] = (x_ref[...] + pe_ref[...]).astype(o_ref.dtype)


# ~2 MiB per x-block: x + out + pe streams, double-buffered, stay well inside
# every generation's scoped-VMEM default (16 MiB v5e / 32 MiB v6e / v7x).
_TARGET_BLOCK_BYTES = 2 << 20


def _pick_tiles(B: int, R: int, C: int, itemsize: int, sub: int) -> tuple[int, int]:
    """Pick (Bblk, TS): batch-block and row-tile sizes for ~2 MiB x-blocks.

    TS is always a multiple of `sub` (pe's row extent differs from x's, so the
    row tile must be a sublane multiple rather than "equal to full dim").
    """
    per_row = C * itemsize
    rows_budget = max(sub, _round_down(_TARGET_BLOCK_BYTES // per_row, sub))
    ts = min(_round_up(R, sub), rows_budget)
    bblk = max(1, min(B, _TARGET_BLOCK_BYTES // (ts * per_row)))
    return bblk, ts


def _pallas_add_pe(x3: jnp.ndarray, pe3: jnp.ndarray, bblk: int, ts: int) -> jnp.ndarray:
    """x3: [B, R, C], pe3: [1, Rp, C] with Rp >= R  ->  x3 + pe3[:, :R, :]."""
    B, R, C = x3.shape
    grid = (pl.cdiv(R, ts), pl.cdiv(B, bblk))  # rows outer, batch inner
    return pl.pallas_call(
        _pos_enc_kernel,
        out_shape=jax.ShapeDtypeStruct((B, R, C), x3.dtype),
        grid_spec=pltpu.PrefetchScalarGridSpec(
            num_scalar_prefetch=0,
            grid=grid,
            in_specs=[
                pl.BlockSpec((bblk, ts, C), lambda r, b: (b, r, 0)),  # x
                pl.BlockSpec((1, ts, C), lambda r, b: (0, r, 0)),     # pe (bcast)
            ],
            out_specs=pl.BlockSpec((bblk, ts, C), lambda r, b: (b, r, 0)),
        ),
        compiler_params=pltpu.CompilerParams(
            # Core split on the row axis only (v7x megacore): keeps each core's
            # pe tile resident across its batch loop, even for B == 1 / odd B.
            dimension_semantics=("parallel", "arbitrary"),
        ),
    )(x3, pe3)


class PositionalEncoding:
    """Pallas equivalent of the PyTorch PositionalEncoding module (batch-first)."""

    def __init__(self, d_model: int, max_len: int = 5000, dtype=jnp.float32):
        self.d_model = d_model
        self.max_len = max_len
        self.dtype = jnp.dtype(dtype)

        # --- all pe preprocessing happens ONCE here, not per forward call ---
        self.pe = make_positional_encoding(d_model, max_len).astype(self.dtype)  # [1, L, D]
        # Lane-dense folded layout for the D % 128 != 0 fast path:
        # row-major flatten of (max_len, D), padded to a multiple of 128 lanes.
        flat = self.pe.reshape(-1)
        pad = (-flat.shape[0]) % 128
        if pad:
            flat = jnp.pad(flat, (0, pad))
        self.pe_folded = flat.reshape(1, -1, 128)                                 # [1, Rp, 128]

    def __call__(self, x: jnp.ndarray) -> jnp.ndarray:
        B, S, D = x.shape
        assert D == self.d_model, "d_model mismatch"
        assert S <= self.max_len, "sequence longer than max_len"
        assert x.dtype == self.dtype, "cast x (or construct the module) with a matching dtype"

        itemsize = self.dtype.itemsize
        sub = max(8, 32 // itemsize)  # sublane multiple: 8 f32, 16 bf16/fp16, 32 int8/fp8

        if D % 128 == 0:
            # Lane-dense already: tile over S, index the full [1, max_len, D] pe
            # buffer through the BlockSpec (no pre-slice).
            bblk, ts = _pick_tiles(B, S, D, itemsize, sub)
            return _pallas_add_pe(x, self.pe, bblk, ts)

        if (S * D) % 128 == 0:
            # Fold (S, D) -> (rows, 128) so stores are unmasked, full-lane vst.
            # pe is already precomputed in this layout (self.pe_folded).
            rows = (S * D) // 128
            # TODO(synk): if this reshape materializes a relayout copy of x, keep
            # activations in the folded layout across adjacent ops or pad D to a
            # multiple of 128 at the model level.
            x3 = x.reshape(B, rows, 128)
            bblk, ts = _pick_tiles(B, rows, 128, itemsize, sub)
            out = _pallas_add_pe(x3, self.pe_folded, bblk, ts)
            return out.reshape(B, S, D)

        # Fallback for awkward shapes (S*D not a multiple of 128): correct, but
        # stores are lane-sparse (masked vst). Still no per-call pe preprocessing.
        bblk, ts = _pick_tiles(B, S, D, itemsize, sub)
        return _pallas_add_pe(x, self.pe, bblk, ts)


if __name__ == "__main__":
    key = jax.random.PRNGKey(0)
    k1, k2, k3 = jax.random.split(key, 3)

    # Case 1: D=32 (not a multiple of 128), S*D multiple of 128 -> folded path.
    B1, S1, D1, ML1 = 2, 8, 32, 64
    posenc1 = PositionalEncoding(D1, ML1)
    x1 = jax.random.normal(k1, (B1, S1, D1), dtype=jnp.float32)
    out1 = jax.block_until_ready(posenc1(x1))
    ref1 = x1 + posenc1.pe[:, :S1, :]
    assert out1.shape == (B1, S1, D1)
    assert jnp.allclose(out1, ref1, atol=1e-6), "mismatch vs reference (fold path)"

    # Case 2: D=128 -> direct S-tiled path, pe indexed from the full buffer.
    B2, S2, D2, ML2 = 2, 16, 128, 64
    posenc2 = PositionalEncoding(D2, ML2)
    x2 = jax.random.normal(k2, (B2, S2, D2), dtype=jnp.float32)
    out2 = jax.block_until_ready(posenc2(x2))
    ref2 = x2 + posenc2.pe[:, :S2, :]
    assert out2.shape == (B2, S2, D2)
    assert jnp.allclose(out2, ref2, atol=1e-6), "mismatch vs reference (direct path)"

    # Case 3: D=40, S*D not a multiple of 128 -> lane-sparse fallback path.
    B3, S3, D3, ML3 = 2, 8, 40, 64
    posenc3 = PositionalEncoding(D3, ML3)
    x3 = jax.random.normal(k3, (B3, S3, D3), dtype=jnp.float32)
    out3 = jax.block_until_ready(posenc3(x3))
    ref3 = x3 + posenc3.pe[:, :S3, :]
    assert out3.shape == (B3, S3, D3)
    assert jnp.allclose(out3, ref3, atol=1e-6), "mismatch vs reference (fallback path)"

    print("KERNEL_OK")
</pallas_src>

<mosaic_0001>
module attributes {stable_mosaic.version = 11 : i64} {
  func.func @_pos_enc_kernel(%arg0: i32, %arg1: i32, %arg2: memref<2x8x128xf32, #tpu.memory_space<vmem>>, %arg3: memref<1x8x128xf32, #tpu.memory_space<vmem>>, %arg4: memref<2x8x128xf32, #tpu.memory_space<vmem>>) attributes {dimension_semantics = [#tpu.dimension_semantics<parallel>, #tpu.dimension_semantics<arbitrary>], iteration_bounds = array<i64: 1, 1>, scalar_prefetch = 0 : i64, scratch_operands = 0 : i64, tpu.core_type = #tpu.core_type<tc>, window_params = [{transform_indices = @transform_0, window_bounds = array<i64: 2, 8, 128>}, {transform_indices = @transform_1, window_bounds = array<i64: 1, 8, 128>}, {transform_indices = @transform_2, window_bounds = array<i64: 2, 8, 128>}]} {
    %c0 = arith.constant 0 : index
    %c0_0 = arith.constant 0 : index
    %c0_1 = arith.constant 0 : index
    %0 = vector.load %arg2[%c0, %c0_0, %c0_1] : memref<2x8x128xf32, #tpu.memory_space<vmem>>, vector<2x8x128xf32>
    %c0_2 = arith.constant 0 : index
    %c0_3 = arith.constant 0 : index
    %c0_4 = arith.constant 0 : index
    %1 = vector.load %arg3[%c0_2, %c0_3, %c0_4] : memref<1x8x128xf32, #tpu.memory_space<vmem>>, vector<1x8x128xf32>
    %2 = vector.broadcast %1 : vector<1x8x128xf32> to vector<2x8x128xf32>
    %3 = arith.addf %0, %2 : vector<2x8x128xf32>
    %c0_5 = arith.constant 0 : index
    %c0_6 = arith.constant 0 : index
    %c0_7 = arith.constant 0 : index
    %4 = vector.load %arg4[%c0_5, %c0_6, %c0_7] : memref<2x8x128xf32, #tpu.memory_space<vmem>>, vector<2x8x128xf32>
    tpu.vector_store %arg4[%c0_5, %c0_6, %c0_7], %3 {strides = array<i32>} : memref<2x8x128xf32, #tpu.memory_space<vmem>>, vector<2x8x128xf32>,
    return
  }
  func.func @transform_0(%arg0: i32, %arg1: i32) -> (i32, i32, i32) {
    %c0_i32 = arith.constant 0 : i32
    %c0_i32_0 = arith.constant 0 : i32
    return %arg1, %arg0, %c0_i32 : i32, i32, i32
  }
  func.func @transform_1(%arg0: i32, %arg1: i32) -> (i32, i32, i32) {
    %c0_i32 = arith.constant 0 : i32
    %c0_i32_0 = arith.constant 0 : i32
    %c0_i32_1 = arith.constant 0 : i32
    return %c0_i32, %arg0, %c0_i32_0 : i32, i32, i32
  }
  func.func @transform_2(%arg0: i32, %arg1: i32) -> (i32, i32, i32) {
    %c0_i32 = arith.constant 0 : i32
    %c0_i32_0 = arith.constant 0 : i32
    return %arg1, %arg0, %c0_i32 : i32, i32, i32
  }
}

</mosaic_0001>

<llo_original>
// kernel: tpu_custom_call.1
$region0: #{tpu_custom_call.1}
  #allocation0 [shape = 'u32[]', space=smem, size = 0x4, offset = 0x4, fixed_abs, tag = 'smem constant byte address 0x4 - core index']
  #allocation1 [shape = 'u32[144,128]{1,0:T(1,128)}', space=vmem, size = 0x12000, scoped, tag = 'internal scratch']
  #allocation8 [shape = 's32[]', space=sflag, size = 0x4, offset = 0, fixed_abs, tag = 'sflag constant byte address 0x0 - dummy sync flag']
  #allocation10 [shape = 's32[]', space=sflag, size = 0x4, offset = 0, fixed_abs, tag = 'sflag constant byte address 0x0 - dummy sync flag']
  %s0 = inlined_call_operand.hbm [shape: f32[2,2,128], index: 0, kind: input, shape index: {}]
  %s1 = inlined_call_operand.hbm [shape: f32[1,16,128], index: 1, kind: input, shape index: {}]
  %s2 = inlined_call_operand.hbm [shape: f32[2,2,128], index: 2, kind: output, shape index: {}]
  %s3 = sld [smem:[#allocation0]]
  $region26: #{tpu_custom_call.1} parent=0
    _
  %s5 = ssub.s32 1, %s3
  %s6 = scalar_select 0, %s5, %s3
  $region1: #{tpu_custom_call.1} parent=0
    #allocation2 [shape = 'u8[8192]{0}', space=vmem, size = 0x2000, scoped, tag = 'input window, operand 0, single buffered']
    #allocation3 [shape = 's32[1]{0}', space=sflag, size = 0x4, scoped, tag = 'scoped memory for tpu_custom_call.1']
    #allocation4 [shape = 's32[1]{0}', space=sflag, size = 0x4, scoped, tag = 'scoped memory for tpu_custom_call.1']
    #allocation5 [shape = 'u8[4096]{0}', space=vmem, size = 0x1000, scoped, tag = 'input window, operand 1, single buffered']
    #allocation6 [shape = 's32[1]{0}', space=sflag, size = 0x4, scoped, tag = 'scoped memory for tpu_custom_call.1']
    #allocation7 [shape = 'u8[8192]{0}', space=vmem, size = 0x2000, scoped, tag = 'output window, operand 0, single buffered']
    %7 = vsyncpa [#allocation3], 0
    %8 = vsyncpa [#allocation6], 0
    %9 = vsyncpa [#allocation4], 0
    // Predicated region
    $region2: #{tpu_custom_call.1} parent=1 // pred_check
      _
    $region3: #{tpu_custom_call.1} parent=1 // pred_check_branch
      %11 = sbr.rel (0) target = $region5
    $region4: #{tpu_custom_call.1} parent=1 // pred_region
      #allocation9 [shape = 'u32[6]{0}', space=smem, size = 0x18, scoped, tag = 'DMA stride descriptor']
      %s13 = ssub.s32 256, 64
      %14 = vsyncadd [#allocation3], %s13
      %s16 = sshll.u32 1, 14
      %s17 = sxor.u32 4294967295, %s16
      %s19 = sld [smem:[#allocation0]]
      %s20 = sadd.s32 2, %s19
      %s22 = sshll.u32 7, 26
      %s23 = sxor.u32 4294967295, %s22
      %s24 = sand.u32 0, %s23
      %s25 = sshll.u32 %s20, 26
      %s26 = sor.u32 %s24, %s25
      %s27 = sshll.u32 [#allocation2], 4
      %s28 = int_to_ptr.vmem [resolvable:$true] %s27
      %34 = sst [smem:[#allocation9]] 32
      %s35 = scalar_lea.smem [#allocation9], 1
      %36 = sst [smem:[%s35]] 128
      %s37 = scalar_lea.smem [#allocation9], 2
      %38 = sst [smem:[%s37]] 1
      %s39 = scalar_lea.smem [#allocation9], 3
      %40 = sst [smem:[%s39]] 32
      %s41 = scalar_lea.smem [#allocation9], 4
      %42 = sst [smem:[%s41]] 32
      %s43 = scalar_lea.smem [#allocation9], 5
      %44 = sst [smem:[%s43]] 2
      %46 = dma.general %s0, 64, %s28, [#allocation3], [#allocation8], [#allocation9], %s26, 0
    $region5: #{tpu_custom_call.1} parent=1 // pred_fallthru
      _
    // Predicated region
    $region6: #{tpu_custom_call.1} parent=1 // pred_check
      _
    $region7: #{tpu_custom_call.1} parent=1 // pred_check_branch
      %48 = sbr.rel (0) target = $region9
    $region8: #{tpu_custom_call.1} parent=1 // pred_region
      %s50 = ssub.s32 128, 128
      %51 = vsyncadd [#allocation6], %s50
      %s53 = sshll.u32 [#allocation5], 4
      %s54 = int_to_ptr.vmem [resolvable:$true] %s53
      %56 = dma.hbm_to_vmem [thread:$0]  %s1, 128, %s54, [#allocation6]
    $region9: #{tpu_custom_call.1} parent=1 // pred_fallthru
      _
    // Predicated region
    $region10: #{tpu_custom_call.1} parent=1 // pred_check
      _
    $region11: #{tpu_custom_call.1} parent=1 // pred_check_branch
      %58 = sbr.rel (0) target = $region13
    $region12: #{tpu_custom_call.1} parent=1 // pred_region
      %59 = dma.done [#allocation3], 256
    $region13: #{tpu_custom_call.1} parent=1 // pred_fallthru
      _
    // Predicated region
    $region14: #{tpu_custom_call.1} parent=1 // pred_check
      _
    $region15: #{tpu_custom_call.1} parent=1 // pred_check_branch
      %61 = sbr.rel (0) target = $region17
    $region16: #{tpu_custom_call.1} parent=1 // pred_region
      %62 = dma.done [#allocation6], 128
    $region17: #{tpu_custom_call.1} parent=1 // pred_fallthru
      _
    %v63 = vld [vmem:[#allocation2] sm:$0xff]
    %v64 = vld [vmem:[#allocation2 + $0x8] sm:$0xff]
    %v65 = vld [vmem:[#allocation5] sm:$0xff]
    %v66 = vadd.f32 %v63, %v65
    %v67 = vadd.f32 %v64, %v65
    %68 = vst [vmem:[#allocation7] sm:$0xff] %v66
    %69 = vst [vmem:[#allocation7 + $0x8] sm:$0xff] %v67
    // Predicated region
    $region18: #{tpu_custom_call.1} parent=1 // pred_check
      _
    $region19: #{tpu_custom_call.1} parent=1 // pred_check_branch
      %71 = sbr.rel (0) target = $region21
    $region20: #{tpu_custom_call.1} parent=1 // pred_region
      #allocation11 [shape = 'u32[6]{0}', space=smem, size = 0x18, scoped, tag = 'DMA stride descriptor']
      %s73 = ssub.s32 256, 64
      %74 = vsyncadd [#allocation4], %s73
      %s76 = sshll.u32 1, 14
      %s77 = sxor.u32 4294967295, %s76
      %s80 = sshll.u32 7, 18
      %s81 = sxor.u32 4294967295, %s80
      %s82 = sand.u32 0, %s81
      %s84 = sor.u32 %s82, 0
      %s86 = sshll.u32 3, 24
      %s87 = sxor.u32 4294967295, %s86
      %s88 = sand.u32 %s84, %s87
      %s90 = sor.u32 %s88, 0
      %s91 = sshll.u32 [#allocation7], 4
      %s92 = int_to_ptr.vmem [resolvable:$true] %s91
      %98 = sst [smem:[#allocation11]] 128
      %s99 = scalar_lea.smem [#allocation11], 1
      %100 = sst [smem:[%s99]] 32
      %s101 = scalar_lea.smem [#allocation11], 2
      %102 = sst [smem:[%s101]] 1
      %s103 = scalar_lea.smem [#allocation11], 3
      %104 = sst [smem:[%s103]] 32
      %s105 = scalar_lea.smem [#allocation11], 4
      %106 = sst [smem:[%s105]] 32
      %s107 = scalar_lea.smem [#allocation11], 5
      %108 = sst [smem:[%s107]] 2
      %110 = dma.general %s92, 64, %s2, [#allocation4], [#allocation10], [#allocation11], %s90, 0
    $region21: #{tpu_custom_call.1} parent=1 // pred_fallthru
      _
    // Predicated region
    $region22: #{tpu_custom_call.1} parent=1 // pred_check
      _
    $region23: #{tpu_custom_call.1} parent=1 // pred_check_branch
      %112 = sbr.rel (0) target = $region25
    $region24: #{tpu_custom_call.1} parent=1 // pred_region
      %113 = dma.done [#allocation4], 256
    $region25: #{tpu_custom_call.1} parent=1 // pred_fallthru
      _
    %114 = vsyncpa [#allocation3], 1
    %115 = vsyncpa [#allocation6], 1
    %116 = vsyncpa [#allocation4], 1

</llo_original>
